<compile_context>
chip_gen: v7x
topology: tpu7x:2x2x1
jax: 0.10.0
libtpu: 0.0.40
codegen_flags: <defaults>
</compile_context>

<pallas_src>
import jax
import jax.numpy as jnp
from jax.experimental import pallas as pl
from jax.experimental.pallas import tpu as pltpu

# Problem sizes (consistent with the PyTorch module)
N, CIN, H, W = 2, 3, 16, 16
K = 3
COUT = 32
HO, WO = H - K + 1, W - K + 1          # 14, 14 (valid conv)
HW = HO * WO                           # 196
NHW = N * HW                           # 392 (multiple of 8 -> sublane aligned)
KC = K * K * CIN                       # 27  (im2col contraction dim)
KCB = KC + 1                           # 28  (+1 ones column for the folded bias)
NROWS = NHW + N                        # 394 (392 patch rows + 2 mean-pool rows)
DLIN = 64


def testmodel_kernel(patches_ref, wconv_ref, wlin_ref, blin_ref,
                     conv_ref, pool_ref, lin_ref):
    """Whole problem lives in VMEM; one conv matmul + one tiny linear matmul.

    patches_ref: (NROWS, KCB)  rows 0..391 = im2col patches (n,ho,wo) x (cin,kh,kw)+ones,
                               rows 392..393 = per-sample mean-patch rows (pool fold)
    wconv_ref:   (KCB, COUT)   conv weight with bias as the last contraction row
    wlin_ref:    (COUT, DLIN)  linear weight transposed to (in, out)
    blin_ref:    (1, DLIN)
    conv_ref:    (NHW, COUT)   conv1 output slab
    pool_ref:    (N, COUT)     global-average-pool output
    lin_ref:     (N, DLIN)     linear output
    """
    # Conv2d (+ bias) AND AdaptiveAvgPool2d(1) as ONE MXU matmul over the slab.
    conv_full = jnp.dot(patches_ref[...], wconv_ref[...],
                        preferred_element_type=jnp.float32)        # (394, 32)

    conv_ref[...] = conv_full[:NHW, :]                             # conv1_out rows
    pooled = conv_full[NHW:NHW + N, :]                             # pooled rows (2, 32)
    pool_ref[...] = pooled

    # Linear(32 -> 64) fused on the pooled rows.
    lin_ref[...] = jnp.dot(pooled, wlin_ref[...],
                           preferred_element_type=jnp.float32) + blin_ref[...]


def prepare_params(wconv, bconv, wlin, blin):
    """Static parameter packing — run ONCE at init, outside the per-call jit path.

    wconv: (COUT, CIN, K, K), bconv: (COUT,), wlin: (DLIN, COUT), blin: (DLIN,)
    """
    wconv_k = wconv.reshape(COUT, KC).T                            # (27, 32), (cin,kh,kw) rows
    wconv_b = jnp.concatenate([wconv_k, bconv.reshape(1, COUT)], axis=0)   # (28, 32)
    wlin_t = wlin.T                                                # (32, 64)
    blin_row = blin.reshape(1, DLIN)                               # (1, 64)
    return wconv_b, wlin_t, blin_row


def testmodel_forward(x, wconv_b, wlin_t, blin_row):
    """x: (N, CIN, H, W) NCHW float32; weights pre-packed by prepare_params()."""
    # im2col directly from NCHW (no NHWC relayout), with the ones column for the
    # folded bias, then N per-sample mean rows appended for the folded avg-pool.
    slices = [x[:, c, kh:kh + HO, kw:kw + WO]
              for c in range(CIN) for kh in range(K) for kw in range(K)]
    slices.append(jnp.ones((N, HO, WO), jnp.float32))
    patches = jnp.stack(slices, axis=-1).reshape(NHW, KCB)         # (392, 28)
    mean_rows = patches.reshape(N, HW, KCB).mean(axis=1)           # (2, 28)
    patches_full = jnp.concatenate([patches, mean_rows], axis=0)   # (394, 28)

    vmem = pl.BlockSpec(memory_space=pltpu.MemorySpace.VMEM)
    conv_flat, pooled, lin = pl.pallas_call(
        testmodel_kernel,
        out_shape=(
            jax.ShapeDtypeStruct((NHW, COUT), jnp.float32),
            jax.ShapeDtypeStruct((N, COUT), jnp.float32),
            jax.ShapeDtypeStruct((N, DLIN), jnp.float32),
        ),
        in_specs=[vmem] * 4,
        out_specs=(vmem, vmem, vmem),
    )(patches_full, wconv_b, wlin_t, blin_row)

    # Layout plumbing back to PyTorch NCHW (required by the module's output contract);
    # now operates on the 50 KB un-padded slab.
    conv1_out = jnp.transpose(conv_flat.reshape(N, HO, WO, COUT), (0, 3, 1, 2))
    avgpool_out = pooled.reshape(N, COUT, 1, 1)
    return {'conv1_out': conv1_out, 'avgpool_out': avgpool_out,
            'flat': pooled, 'layer1_out': lin}


if __name__ == "__main__":
    key = jax.random.PRNGKey(0)
    kx, kw1, kb1, kw2, kb2 = jax.random.split(key, 5)

    # Deterministic synthetic parameters (PyTorch-like fan-in scaling).
    x = jax.random.normal(kx, (N, CIN, H, W), jnp.float32)
    wconv = jax.random.normal(kw1, (COUT, CIN, K, K), jnp.float32) * (1.0 / (CIN * K * K) ** 0.5)
    bconv = jax.random.normal(kb1, (COUT,), jnp.float32) * 0.05
    wlin = jax.random.normal(kw2, (DLIN, COUT), jnp.float32) * (1.0 / COUT ** 0.5)
    blin = jax.random.normal(kb2, (DLIN,), jnp.float32) * 0.05

    # Static prep once; the jitted forward only sees pre-packed operands.
    params = prepare_params(wconv, bconv, wlin, blin)
    params = jax.block_until_ready(params)

    fwd = jax.jit(testmodel_forward)
    out = fwd(x, *params)
    jax.block_until_ready(out)

    # Reference check (plain JAX / XLA).
    ref_conv = jax.lax.conv_general_dilated(
        x, wconv, window_strides=(1, 1), padding='VALID',
        dimension_numbers=('NCHW', 'OIHW', 'NCHW')) + bconv.reshape(1, COUT, 1, 1)
    ref_pool = jnp.mean(ref_conv, axis=(2, 3))
    ref_lin = ref_pool @ wlin.T + blin

    assert out['conv1_out'].shape == (N, COUT, HO, WO)
    assert out['avgpool_out'].shape == (N, COUT, 1, 1)
    assert out['flat'].shape == (N, COUT)
    assert out['layer1_out'].shape == (N, DLIN)
    assert jnp.allclose(out['conv1_out'], ref_conv, atol=1e-4, rtol=1e-4)
    assert jnp.allclose(out['flat'], ref_pool, atol=1e-4, rtol=1e-4)
    assert jnp.allclose(out['avgpool_out'], ref_pool.reshape(N, COUT, 1, 1), atol=1e-4, rtol=1e-4)
    assert jnp.allclose(out['layer1_out'], ref_lin, atol=1e-4, rtol=1e-4)

    print("KERNEL_OK")
</pallas_src>

<mosaic_0001>
module attributes {stable_mosaic.version = 11 : i64} {
  func.func @testmodel_kernel(%arg0: memref<394x28xf32, #tpu.memory_space<vmem>>, %arg1: memref<28x32xf32, #tpu.memory_space<vmem>>, %arg2: memref<32x64xf32, #tpu.memory_space<vmem>>, %arg3: memref<1x64xf32, #tpu.memory_space<vmem>>, %arg4: memref<392x32xf32, #tpu.memory_space<vmem>>, %arg5: memref<2x32xf32, #tpu.memory_space<vmem>>, %arg6: memref<2x64xf32, #tpu.memory_space<vmem>>) attributes {dimension_semantics = [], scalar_prefetch = 0 : i64, scratch_operands = 0 : i64, tpu.core_type = #tpu.core_type<tc>} {
    %c0 = arith.constant 0 : index
    %c0_0 = arith.constant 0 : index
    %0 = vector.load %arg0[%c0, %c0_0] : memref<394x28xf32, #tpu.memory_space<vmem>>, vector<394x28xf32>
    %c0_1 = arith.constant 0 : index
    %c0_2 = arith.constant 0 : index
    %1 = vector.load %arg1[%c0_1, %c0_2] : memref<28x32xf32, #tpu.memory_space<vmem>>, vector<28x32xf32>
    %cst = arith.constant dense<0.000000e+00> : vector<394x32xf32>
    %2 = tpu.matmul %0, %1, %cst {dimension_numbers = #tpu.dot_dimension_numbers<[1], [0], [0], [1], [0, 0, 1, 1], [], []>} : vector<394x28xf32>, vector<28x32xf32>, vector<394x32xf32> -> vector<394x32xf32>
    %3 = vector.extract_strided_slice %2 {offsets = [0, 0], sizes = [392, 32], strides = [1, 1]} : vector<394x32xf32> to vector<392x32xf32>
    %c0_3 = arith.constant 0 : index
    %c0_4 = arith.constant 0 : index
    %4 = vector.load %arg4[%c0_3, %c0_4] : memref<392x32xf32, #tpu.memory_space<vmem>>, vector<392x32xf32>
    tpu.vector_store %arg4[%c0_3, %c0_4], %3 {strides = array<i32>} : memref<392x32xf32, #tpu.memory_space<vmem>>, vector<392x32xf32>,
    %5 = vector.extract_strided_slice %2 {offsets = [392, 0], sizes = [2, 32], strides = [1, 1]} : vector<394x32xf32> to vector<2x32xf32>
    %c0_5 = arith.constant 0 : index
    %c0_6 = arith.constant 0 : index
    %6 = vector.load %arg5[%c0_5, %c0_6] : memref<2x32xf32, #tpu.memory_space<vmem>>, vector<2x32xf32>
    tpu.vector_store %arg5[%c0_5, %c0_6], %5 {strides = array<i32>} : memref<2x32xf32, #tpu.memory_space<vmem>>, vector<2x32xf32>,
    %c0_7 = arith.constant 0 : index
    %c0_8 = arith.constant 0 : index
    %7 = vector.load %arg2[%c0_7, %c0_8] : memref<32x64xf32, #tpu.memory_space<vmem>>, vector<32x64xf32>
    %cst_9 = arith.constant dense<0.000000e+00> : vector<2x64xf32>
    %8 = tpu.matmul %5, %7, %cst_9 {dimension_numbers = #tpu.dot_dimension_numbers<[1], [0], [0], [1], [0, 0, 1, 1], [], []>} : vector<2x32xf32>, vector<32x64xf32>, vector<2x64xf32> -> vector<2x64xf32>
    %c0_10 = arith.constant 0 : index
    %c0_11 = arith.constant 0 : index
    %9 = vector.load %arg3[%c0_10, %c0_11] : memref<1x64xf32, #tpu.memory_space<vmem>>, vector<1x64xf32>
    %10 = vector.broadcast %9 : vector<1x64xf32> to vector<2x64xf32>
    %11 = arith.addf %8, %10 : vector<2x64xf32>
    %c0_12 = arith.constant 0 : index
    %c0_13 = arith.constant 0 : index
    %12 = vector.load %arg6[%c0_12, %c0_13] : memref<2x64xf32, #tpu.memory_space<vmem>>, vector<2x64xf32>
    tpu.vector_store %arg6[%c0_12, %c0_13], %11 {strides = array<i32>} : memref<2x64xf32, #tpu.memory_space<vmem>>, vector<2x64xf32>,
    return
  }
}

</mosaic_0001>

<llo_original>
// kernel: testmodel_forward.1
$region0: #{testmodel_forward.1}
  #allocation0 [shape = 'u32[]', space=smem, size = 0x4, offset = 0x4, fixed_abs, tag = 'smem constant byte address 0x4 - core index']
  #allocation1 [shape = 'u32[144,128]{1,0:T(1,128)}', space=vmem, size = 0x12000, scoped, tag = 'internal scratch']
  %s0 = inlined_call_operand.vmem [shape: f32[394,28], index: 0, kind: input, shape index: {}]
  %s1 = inlined_call_operand.vmem [shape: f32[28,32], index: 1, kind: input, shape index: {}]
  %s2 = inlined_call_operand.vmem [shape: f32[32,64], index: 2, kind: input, shape index: {}]
  %s3 = inlined_call_operand.vmem [shape: f32[1,64], index: 3, kind: input, shape index: {}]
  %s4 = inlined_call_operand.vmem [shape: f32[392,32], index: 4, kind: output, shape index: {0}]
  %s5 = inlined_call_operand.vmem [shape: f32[2,32], index: 5, kind: output, shape index: {1}]
  %s6 = inlined_call_operand.hbm [shape: f32[2,64], index: 6, kind: output, shape index: {2}]
  %7 = xla_tuple %s4, %s5, %s6
  %s8 = sld [smem:[#allocation0]]
  $region42: #{testmodel_forward.1} parent=0
    _
  %s10 = ssub.s32 1, %s8
  %s11 = scalar_select 0, %s10, %s8
  $region1: #{testmodel_forward.1} parent=0
    #allocation2 [shape = 'u8[1024]{0}', space=vmem, size = 0x400, scoped, tag = 'output window, operand 2, single buffered']
    #allocation3 [shape = 's32[1]{0}', space=sflag, size = 0x4, scoped, tag = 'scoped memory for testmodel_forward.1']
    %12 = vsyncpa [#allocation3], 0
    // Predicated region
    $region2: #{testmodel_forward.1} parent=1 // pred_check
      _
    $region3: #{testmodel_forward.1} parent=1 // pred_check_branch
      %14 = sbr.rel (0) target = $region5
    $region4: #{testmodel_forward.1} parent=1 // pred_region
      _
    $region5: #{testmodel_forward.1} parent=1 // pred_fallthru
      _
    // Predicated region
    $region6: #{testmodel_forward.1} parent=1 // pred_check
      _
    $region7: #{testmodel_forward.1} parent=1 // pred_check_branch
      %16 = sbr.rel (0) target = $region9
    $region8: #{testmodel_forward.1} parent=1 // pred_region
      _
    $region9: #{testmodel_forward.1} parent=1 // pred_fallthru
      _
    // Predicated region
    $region10: #{testmodel_forward.1} parent=1 // pred_check
      _
    $region11: #{testmodel_forward.1} parent=1 // pred_check_branch
      %18 = sbr.rel (0) target = $region13
    $region12: #{testmodel_forward.1} parent=1 // pred_region
      _
    $region13: #{testmodel_forward.1} parent=1 // pred_fallthru
      _
    // Predicated region
    $region14: #{testmodel_forward.1} parent=1 // pred_check
      _
    $region15: #{testmodel_forward.1} parent=1 // pred_check_branch
      %20 = sbr.rel (0) target = $region17
    $region16: #{testmodel_forward.1} parent=1 // pred_region
      _
    $region17: #{testmodel_forward.1} parent=1 // pred_fallthru
      _
    %v21 = vld [vmem:[%s0] sm:$0xff]
    %v22 = vld [vmem:[%s0 + $0x8] sm:$0xff]
    %v23 = vld [vmem:[%s0 + $0x10] sm:$0xff]
    %v24 = vld [vmem:[%s0 + $0x18] sm:$0xff]
    %v25 = vld [vmem:[%s0 + $0x20] sm:$0xff]
    %v26 = vld [vmem:[%s0 + $0x28] sm:$0xff]
    %v27 = vld [vmem:[%s0 + $0x30] sm:$0xff]
    %v28 = vld [vmem:[%s0 + $0x38] sm:$0xff]
    %v29 = vld [vmem:[%s0 + $0x40] sm:$0xff]
    %v30 = vld [vmem:[%s0 + $0x48] sm:$0xff]
    %v31 = vld [vmem:[%s0 + $0x50] sm:$0xff]
    %v32 = vld [vmem:[%s0 + $0x58] sm:$0xff]
    %v33 = vld [vmem:[%s0 + $0x60] sm:$0xff]
    %v34 = vld [vmem:[%s0 + $0x68] sm:$0xff]
    %v35 = vld [vmem:[%s0 + $0x70] sm:$0xff]
    %v36 = vld [vmem:[%s0 + $0x78] sm:$0xff]
    %v37 = vld [vmem:[%s0 + $0x80] sm:$0xff]
    %v38 = vld [vmem:[%s0 + $0x88] sm:$0xff]
    %v39 = vld [vmem:[%s0 + $0x90] sm:$0xff]
    %v40 = vld [vmem:[%s0 + $0x98] sm:$0xff]
    %v41 = vld [vmem:[%s0 + $0xa0] sm:$0xff]
    %v42 = vld [vmem:[%s0 + $0xa8] sm:$0xff]
    %v43 = vld [vmem:[%s0 + $0xb0] sm:$0xff]
    %v44 = vld [vmem:[%s0 + $0xb8] sm:$0xff]
    %v45 = vld [vmem:[%s0 + $0xc0] sm:$0xff]
    %v46 = vld [vmem:[%s0 + $0xc8] sm:$0xff]
    %v47 = vld [vmem:[%s0 + $0xd0] sm:$0xff]
    %v48 = vld [vmem:[%s0 + $0xd8] sm:$0xff]
    %v49 = vld [vmem:[%s0 + $0xe0] sm:$0xff]
    %v50 = vld [vmem:[%s0 + $0xe8] sm:$0xff]
    %v51 = vld [vmem:[%s0 + $0xf0] sm:$0xff]
    %v52 = vld [vmem:[%s0 + $0xf8] sm:$0xff]
    %v53 = vld [vmem:[%s0 + $0x100] sm:$0xff]
    %v54 = vld [vmem:[%s0 + $0x108] sm:$0xff]
    %v55 = vld [vmem:[%s0 + $0x110] sm:$0xff]
    %v56 = vld [vmem:[%s0 + $0x118] sm:$0xff]
    %v57 = vld [vmem:[%s0 + $0x120] sm:$0xff]
    %v58 = vld [vmem:[%s0 + $0x128] sm:$0xff]
    %v59 = vld [vmem:[%s0 + $0x130] sm:$0xff]
    %v60 = vld [vmem:[%s0 + $0x138] sm:$0xff]
    %v61 = vld [vmem:[%s0 + $0x140] sm:$0xff]
    %v62 = vld [vmem:[%s0 + $0x148] sm:$0xff]
    %v63 = vld [vmem:[%s0 + $0x150] sm:$0xff]
    %v64 = vld [vmem:[%s0 + $0x158] sm:$0xff]
    %v65 = vld [vmem:[%s0 + $0x160] sm:$0xff]
    %v66 = vld [vmem:[%s0 + $0x168] sm:$0xff]
    %v67 = vld [vmem:[%s0 + $0x170] sm:$0xff]
    %v68 = vld [vmem:[%s0 + $0x178] sm:$0xff]
    %v69 = vld [vmem:[%s0 + $0x180] sm:$0xff]
    %v70 = vld [vmem:[%s0 + $0x188] sm:$0x3]
    %v71 = vld [vmem:[%s1] sm:$0xff]
    %v72 = vld [vmem:[%s1 + $0x8] sm:$0xff]
    %v73 = vld [vmem:[%s1 + $0x10] sm:$0xff]
    %v74 = vld [vmem:[%s1 + $0x18] sm:$0xf]
    %vm75 = vcmask 228352
    %v77 = vsel %vm75, %v21, 0
    %v80 = vsel %vm75, %v22, 0
    %v83 = vsel %vm75, %v23, 0
    %v86 = vsel %vm75, %v24, 0
    %v89 = vsel %vm75, %v25, 0
    %v92 = vsel %vm75, %v26, 0
    %v95 = vsel %vm75, %v27, 0
    %v98 = vsel %vm75, %v28, 0
    %v101 = vsel %vm75, %v29, 0
    %v104 = vsel %vm75, %v30, 0
    %v107 = vsel %vm75, %v31, 0
    %v110 = vsel %vm75, %v32, 0
    %v113 = vsel %vm75, %v33, 0
    %v116 = vsel %vm75, %v34, 0
    %v119 = vsel %vm75, %v35, 0
    %v122 = vsel %vm75, %v36, 0
    %v125 = vsel %vm75, %v37, 0
    %v128 = vsel %vm75, %v38, 0
    %v131 = vsel %vm75, %v39, 0
    %v134 = vsel %vm75, %v40, 0
    %v137 = vsel %vm75, %v41, 0
    %v140 = vsel %vm75, %v42, 0
    %v143 = vsel %vm75, %v43, 0
    %v146 = vsel %vm75, %v44, 0
    %v149 = vsel %vm75, %v45, 0
    %v152 = vsel %vm75, %v46, 0
    %v155 = vsel %vm75, %v47, 0
    %v158 = vsel %vm75, %v48, 0
    %v161 = vsel %vm75, %v49, 0
    %v164 = vsel %vm75, %v50, 0
    %v167 = vsel %vm75, %v51, 0
    %v170 = vsel %vm75, %v52, 0
    %v173 = vsel %vm75, %v53, 0
    %v176 = vsel %vm75, %v54, 0
    %v179 = vsel %vm75, %v55, 0
    %v182 = vsel %vm75, %v56, 0
    %v185 = vsel %vm75, %v57, 0
    %v188 = vsel %vm75, %v58, 0
    %v191 = vsel %vm75, %v59, 0
    %v194 = vsel %vm75, %v60, 0
    %v197 = vsel %vm75, %v61, 0
    %v200 = vsel %vm75, %v62, 0
    %v203 = vsel %vm75, %v63, 0
    %v206 = vsel %vm75, %v64, 0
    %v209 = vsel %vm75, %v65, 0
    %v212 = vsel %vm75, %v66, 0
    %v215 = vsel %vm75, %v67, 0
    %v218 = vsel %vm75, %v68, 0
    %v221 = vsel %vm75, %v69, 0
    %v224 = vsel %vm75, %v70, 0
    %vm226 = vcmask 1043456
    %v228 = vsel %vm226, %v74, 0
    %230 = vmatprep.subr.mxu0 0.0
    %231 = vmatpush1.msra.mxu0 %v71
    %232 = vmatprep.subr.mxu0 0.0
    %233 = vmatpush1.msra.mxu0 %v72
    %234 = vmatprep.subr.mxu0 0.0
    %235 = vmatpush1.msra.mxu0 %v73
    %236 = vmatprep.subr.mxu0 0.0
    %237 = vmatpush1.msra.mxu0 %v228
    %238 = vmatprep.subr.mxu0 0.0
    %239 = vmatpush1.msra.mxu0 0.0
    %240 = vmatprep.subr.mxu0 0.0
    %241 = vmatpush1.msra.mxu0 0.0
    %242 = vmatprep.subr.mxu0 0.0
    %243 = vmatpush1.msra.mxu0 0.0
    %244 = vmatprep.subr.mxu0 0.0
    %245 = vmatpush1.msra.mxu0 0.0
    %246 = vmatprep.subr.mxu0 0.0
    %247 = vmatpush1.msra.mxu0 0.0
    %248 = vmatprep.subr.mxu0 0.0
    %249 = vmatpush1.msra.mxu0 0.0
    %250 = vmatprep.subr.mxu0 0.0
    %251 = vmatpush1.msra.mxu0 0.0
    %252 = vmatprep.subr.mxu0 0.0
    %253 = vmatpush1.msra.mxu0 0.0
    %254 = vmatprep.subr.mxu0 0.0
    %255 = vmatpush1.msra.mxu0 0.0
    %256 = vmatprep.subr.mxu0 0.0
    %257 = vmatpush1.msra.mxu0 0.0
    %258 = vmatprep.subr.mxu0 0.0
    %259 = vmatpush1.msra.mxu0 0.0
    %260 = vmatprep.subr.mxu0 0.0
    %261 = vmatpush1.msra.mxu0 0.0
    %262 = vmatprep.subr.mxu0 0.0
    %263 = vmatpush1.msra.mxu0 0.0
    %264 = vmatprep.subr.mxu0 0.0
    %265 = vmatpush1.msra.mxu0 0.0
    %266 = vmatprep.subr.mxu0 0.0
    %267 = vmatpush1.msra.mxu0 0.0
    %268 = vmatprep.subr.mxu0 0.0
    %269 = vmatpush1.msra.mxu0 0.0
    %270 = vmatprep.subr.mxu0 0.0
    %271 = vmatpush1.msra.mxu0 0.0
    %272 = vmatprep.subr.mxu0 0.0
    %273 = vmatpush1.msra.mxu0 0.0
    %274 = vmatprep.subr.mxu0 0.0
    %275 = vmatpush1.msra.mxu0 0.0
    %276 = vmatprep.subr.mxu0 0.0
    %277 = vmatpush1.msra.mxu0 0.0
    %278 = vmatprep.subr.mxu0 0.0
    %279 = vmatpush1.msra.mxu0 0.0
    %280 = vmatprep.subr.mxu0 0.0
    %281 = vmatpush1.msra.mxu0 0.0
    %282 = vmatprep.subr.mxu0 0.0
    %283 = vmatpush1.msra.mxu0 0.0
    %284 = vmatprep.subr.mxu0 0.0
    %285 = vmatpush1.msra.mxu0 0.0
    %286 = vmatprep.subr.mxu0 0.0
    %287 = vmatpush1.msra.mxu0 0.0
    %288 = vmatprep.subr.mxu0 0.0
    %289 = vmatpush1.msra.mxu0 0.0
    %290 = vmatprep.subr.mxu0 0.0
    %291 = vmatpush1.msra.mxu0 0.0
    %292 = vmatprep.subr.mxu0 0.0
    %293 = vmatpush1.msra.mxu0 0.0
    %294 = vmatprep.mubr.f32.mxu0 0.0
    %295 = vmatmul.mubr.f32.gmra.mrb[0].mxu0 %v77
    %v296 = vpop.f32.mrb[0].mxu0
    %v297 = vadd.f32 0.0, %v296
    %v298 = vpop.f32.mrb[0].mxu0
    %299 = vmatprep.mubr.f32.mxu0 0.0
    %300 = vmatmul.mubr.f32.gmra.mrb[0].mxu0 %v80
    %v301 = vpop.f32.mrb[0].mxu0
    %v302 = vadd.f32 0.0, %v301
    %v303 = vpop.f32.mrb[0].mxu0
    %304 = vmatprep.mubr.f32.mxu0 0.0
    %305 = vmatmul.mubr.f32.gmra.mrb[0].mxu0 %v83
    %v306 = vpop.f32.mrb[0].mxu0
    %v307 = vadd.f32 0.0, %v306
    %v308 = vpop.f32.mrb[0].mxu0
    %309 = vmatprep.mubr.f32.mxu0 0.0
    %310 = vmatmul.mubr.f32.gmra.mrb[0].mxu0 %v86
    %v311 = vpop.f32.mrb[0].mxu0
    %v312 = vadd.f32 0.0, %v311
    %v313 = vpop.f32.mrb[0].mxu0
    %314 = vmatprep.mubr.f32.mxu0 0.0
    %315 = vmatmul.mubr.f32.gmra.mrb[0].mxu0 %v89
    %v316 = vpop.f32.mrb[0].mxu0
    %v317 = vadd.f32 0.0, %v316
    %v318 = vpop.f32.mrb[0].mxu0
    %319 = vmatprep.mubr.f32.mxu0 0.0
    %320 = vmatmul.mubr.f32.gmra.mrb[0].mxu0 %v92
    %v321 = vpop.f32.mrb[0].mxu0
    %v322 = vadd.f32 0.0, %v321
    %v323 = vpop.f32.mrb[0].mxu0
    %324 = vmatprep.mubr.f32.mxu0 0.0
    %325 = vmatmul.mubr.f32.gmra.mrb[0].mxu0 %v95
    %v326 = vpop.f32.mrb[0].mxu0
    %v327 = vadd.f32 0.0, %v326
    %v328 = vpop.f32.mrb[0].mxu0
    %329 = vmatprep.mubr.f32.mxu0 0.0
    %330 = vmatmul.mubr.f32.gmra.mrb[0].mxu0 %v98
    %v331 = vpop.f32.mrb[0].mxu0
    %v332 = vadd.f32 0.0, %v331
    %v333 = vpop.f32.mrb[0].mxu0
    %334 = vmatprep.mubr.f32.mxu0 0.0
    %335 = vmatmul.mubr.f32.gmra.mrb[0].mxu0 %v101
    %v336 = vpop.f32.mrb[0].mxu0
    %v337 = vadd.f32 0.0, %v336
    %v338 = vpop.f32.mrb[0].mxu0
    %339 = vmatprep.mubr.f32.mxu0 0.0
    %340 = vmatmul.mubr.f32.gmra.mrb[0].mxu0 %v104
    %v341 = vpop.f32.mrb[0].mxu0
    %v342 = vadd.f32 0.0, %v341
    %v343 = vpop.f32.mrb[0].mxu0
    %344 = vmatprep.mubr.f32.mxu0 0.0
    %345 = vmatmul.mubr.f32.gmra.mrb[0].mxu0 %v107
    %v346 = vpop.f32.mrb[0].mxu0
    %v347 = vadd.f32 0.0, %v346
    %v348 = vpop.f32.mrb[0].mxu0
    %349 = vmatprep.mubr.f32.mxu0 0.0
    %350 = vmatmul.mubr.f32.gmra.mrb[0].mxu0 %v110
    %v351 = vpop.f32.mrb[0].mxu0
    %v352 = vadd.f32 0.0, %v351
    %v353 = vpop.f32.mrb[0].mxu0
    %354 = vmatprep.mubr.f32.mxu0 0.0
    %355 = vmatmul.mubr.f32.gmra.mrb[0].mxu0 %v113
    %v356 = vpop.f32.mrb[0].mxu0
    %v357 = vadd.f32 0.0, %v356
    %v358 = vpop.f32.mrb[0].mxu0
    %359 = vmatprep.mubr.f32.mxu0 0.0
    %360 = vmatmul.mubr.f32.gmra.mrb[0].mxu0 %v116
    %v361 = vpop.f32.mrb[0].mxu0
    %v362 = vadd.f32 0.0, %v361
    %v363 = vpop.f32.mrb[0].mxu0
    %364 = vmatprep.mubr.f32.mxu0 0.0
    %365 = vmatmul.mubr.f32.gmra.mrb[0].mxu0 %v119
    %v366 = vpop.f32.mrb[0].mxu0
    %v367 = vadd.f32 0.0, %v366
    %v368 = vpop.f32.mrb[0].mxu0
    %369 = vmatprep.mubr.f32.mxu0 0.0
    %370 = vmatmul.mubr.f32.gmra.mrb[0].mxu0 %v122
    %v371 = vpop.f32.mrb[0].mxu0
    %v372 = vadd.f32 0.0, %v371
    %v373 = vpop.f32.mrb[0].mxu0
    %374 = vmatprep.mubr.f32.mxu0 0.0
    %375 = vmatmul.mubr.f32.gmra.mrb[0].mxu0 %v125
    %v376 = vpop.f32.mrb[0].mxu0
    %v377 = vadd.f32 0.0, %v376
    %v378 = vpop.f32.mrb[0].mxu0
    %379 = vmatprep.mubr.f32.mxu0 0.0
    %380 = vmatmul.mubr.f32.gmra.mrb[0].mxu0 %v128
    %v381 = vpop.f32.mrb[0].mxu0
    %v382 = vadd.f32 0.0, %v381
    %v383 = vpop.f32.mrb[0].mxu0
    %384 = vmatprep.mubr.f32.mxu0 0.0
    %385 = vmatmul.mubr.f32.gmra.mrb[0].mxu0 %v131
    %v386 = vpop.f32.mrb[0].mxu0
    %v387 = vadd.f32 0.0, %v386
    %v388 = vpop.f32.mrb[0].mxu0
    %389 = vmatprep.mubr.f32.mxu0 0.0
    %390 = vmatmul.mubr.f32.gmra.mrb[0].mxu0 %v134
    %v391 = vpop.f32.mrb[0].mxu0
    %v392 = vadd.f32 0.0, %v391
    %v393 = vpop.f32.mrb[0].mxu0
    %394 = vmatprep.mubr.f32.mxu0 0.0
    %395 = vmatmul.mubr.f32.gmra.mrb[0].mxu0 %v137
    %v396 = vpop.f32.mrb[0].mxu0
    %v397 = vadd.f32 0.0, %v396
    %v398 = vpop.f32.mrb[0].mxu0
    %399 = vmatprep.mubr.f32.mxu0 0.0
    %400 = vmatmul.mubr.f32.gmra.mrb[0].mxu0 %v140
    %v401 = vpop.f32.mrb[0].mxu0
    %v402 = vadd.f32 0.0, %v401
    %v403 = vpop.f32.mrb[0].mxu0
    %404 = vmatprep.mubr.f32.mxu0 0.0
    %405 = vmatmul.mubr.f32.gmra.mrb[0].mxu0 %v143
    %v406 = vpop.f32.mrb[0].mxu0
    %v407 = vadd.f32 0.0, %v406
    %v408 = vpop.f32.mrb[0].mxu0
    %409 = vmatprep.mubr.f32.mxu0 0.0
    %410 = vmatmul.mubr.f32.gmra.mrb[0].mxu0 %v146
    %v411 = vpop.f32.mrb[0].mxu0
    %v412 = vadd.f32 0.0, %v411
    %v413 = vpop.f32.mrb[0].mxu0
    %414 = vmatprep.mubr.f32.mxu0 0.0
    %415 = vmatmul.mubr.f32.gmra.mrb[0].mxu0 %v149
    %v416 = vpop.f32.mrb[0].mxu0
    %v417 = vadd.f32 0.0, %v416
    %v418 = vpop.f32.mrb[0].mxu0
    %419 = vmatprep.mubr.f32.mxu0 0.0
    %420 = vmatmul.mubr.f32.gmra.mrb[0].mxu0 %v152
    %v421 = vpop.f32.mrb[0].mxu0
    %v422 = vadd.f32 0.0, %v421
    %v423 = vpop.f32.mrb[0].mxu0
    %424 = vmatprep.mubr.f32.mxu0 0.0
    %425 = vmatmul.mubr.f32.gmra.mrb[0].mxu0 %v155
    %v426 = vpop.f32.mrb[0].mxu0
    %v427 = vadd.f32 0.0, %v426
    %v428 = vpop.f32.mrb[0].mxu0
    %429 = vmatprep.mubr.f32.mxu0 0.0
    %430 = vmatmul.mubr.f32.gmra.mrb[0].mxu0 %v158
    %v431 = vpop.f32.mrb[0].mxu0
    %v432 = vadd.f32 0.0, %v431
    %v433 = vpop.f32.mrb[0].mxu0
    %434 = vmatprep.mubr.f32.mxu0 0.0
    %435 = vmatmul.mubr.f32.gmra.mrb[0].mxu0 %v161
    %v436 = vpop.f32.mrb[0].mxu0
    %v437 = vadd.f32 0.0, %v436
    %v438 = vpop.f32.mrb[0].mxu0
    %439 = vmatprep.mubr.f32.mxu0 0.0
    %440 = vmatmul.mubr.f32.gmra.mrb[0].mxu0 %v164
    %v441 = vpop.f32.mrb[0].mxu0
    %v442 = vadd.f32 0.0, %v441
    %v443 = vpop.f32.mrb[0].mxu0
    %444 = vmatprep.mubr.f32.mxu0 0.0
    %445 = vmatmul.mubr.f32.gmra.mrb[0].mxu0 %v167
    %v446 = vpop.f32.mrb[0].mxu0
    %v447 = vadd.f32 0.0, %v446
    %v448 = vpop.f32.mrb[0].mxu0
    %449 = vmatprep.mubr.f32.mxu0 0.0
    %450 = vmatmul.mubr.f32.gmra.mrb[0].mxu0 %v170
    %v451 = vpop.f32.mrb[0].mxu0
    %v452 = vadd.f32 0.0, %v451
    %v453 = vpop.f32.mrb[0].mxu0
    %454 = vmatprep.mubr.f32.mxu0 0.0
    %455 = vmatmul.mubr.f32.gmra.mrb[0].mxu0 %v173
    %v456 = vpop.f32.mrb[0].mxu0
    %v457 = vadd.f32 0.0, %v456
    %v458 = vpop.f32.mrb[0].mxu0
    %459 = vmatprep.mubr.f32.mxu0 0.0
    %460 = vmatmul.mubr.f32.gmra.mrb[0].mxu0 %v176
    %v461 = vpop.f32.mrb[0].mxu0
    %v462 = vadd.f32 0.0, %v461
    %v463 = vpop.f32.mrb[0].mxu0
    %464 = vmatprep.mubr.f32.mxu0 0.0
    %465 = vmatmul.mubr.f32.gmra.mrb[0].mxu0 %v179
    %v466 = vpop.f32.mrb[0].mxu0
    %v467 = vadd.f32 0.0, %v466
    %v468 = vpop.f32.mrb[0].mxu0
    %469 = vmatprep.mubr.f32.mxu0 0.0
    %470 = vmatmul.mubr.f32.gmra.mrb[0].mxu0 %v182
    %v471 = vpop.f32.mrb[0].mxu0
    %v472 = vadd.f32 0.0, %v471
    %v473 = vpop.f32.mrb[0].mxu0
    %474 = vmatprep.mubr.f32.mxu0 0.0
    %475 = vmatmul.mubr.f32.gmra.mrb[0].mxu0 %v185
    %v476 = vpop.f32.mrb[0].mxu0
    %v477 = vadd.f32 0.0, %v476
    %v478 = vpop.f32.mrb[0].mxu0
    %479 = vmatprep.mubr.f32.mxu0 0.0
    %480 = vmatmul.mubr.f32.gmra.mrb[0].mxu0 %v188
    %v481 = vpop.f32.mrb[0].mxu0
    %v482 = vadd.f32 0.0, %v481
    %v483 = vpop.f32.mrb[0].mxu0
    %484 = vmatprep.mubr.f32.mxu0 0.0
    %485 = vmatmul.mubr.f32.gmra.mrb[0].mxu0 %v191
    %v486 = vpop.f32.mrb[0].mxu0
    %v487 = vadd.f32 0.0, %v486
    %v488 = vpop.f32.mrb[0].mxu0
    %489 = vmatprep.mubr.f32.mxu0 0.0
    %490 = vmatmul.mubr.f32.gmra.mrb[0].mxu0 %v194
    %v491 = vpop.f32.mrb[0].mxu0
    %v492 = vadd.f32 0.0, %v491
    %v493 = vpop.f32.mrb[0].mxu0
    %494 = vmatprep.mubr.f32.mxu0 0.0
    %495 = vmatmul.mubr.f32.gmra.mrb[0].mxu0 %v197
    %v496 = vpop.f32.mrb[0].mxu0
    %v497 = vadd.f32 0.0, %v496
    %v498 = vpop.f32.mrb[0].mxu0
    %499 = vmatprep.mubr.f32.mxu0 0.0
    %500 = vmatmul.mubr.f32.gmra.mrb[0].mxu0 %v200
    %v501 = vpop.f32.mrb[0].mxu0
    %v502 = vadd.f32 0.0, %v501
    %v503 = vpop.f32.mrb[0].mxu0
    %504 = vmatprep.mubr.f32.mxu0 0.0
    %505 = vmatmul.mubr.f32.gmra.mrb[0].mxu0 %v203
    %v506 = vpop.f32.mrb[0].mxu0
    %v507 = vadd.f32 0.0, %v506
    %v508 = vpop.f32.mrb[0].mxu0
    %509 = vmatprep.mubr.f32.mxu0 0.0
    %510 = vmatmul.mubr.f32.gmra.mrb[0].mxu0 %v206
    %v511 = vpop.f32.mrb[0].mxu0
    %v512 = vadd.f32 0.0, %v511
    %v513 = vpop.f32.mrb[0].mxu0
    %514 = vmatprep.mubr.f32.mxu0 0.0
    %515 = vmatmul.mubr.f32.gmra.mrb[0].mxu0 %v209
    %v516 = vpop.f32.mrb[0].mxu0
    %v517 = vadd.f32 0.0, %v516
    %v518 = vpop.f32.mrb[0].mxu0
    %519 = vmatprep.mubr.f32.mxu0 0.0
    %520 = vmatmul.mubr.f32.gmra.mrb[0].mxu0 %v212
    %v521 = vpop.f32.mrb[0].mxu0
    %v522 = vadd.f32 0.0, %v521
    %v523 = vpop.f32.mrb[0].mxu0
    %524 = vmatprep.mubr.f32.mxu0 0.0
    %525 = vmatmul.mubr.f32.gmra.mrb[0].mxu0 %v215
    %v526 = vpop.f32.mrb[0].mxu0
    %v527 = vadd.f32 0.0, %v526
    %v528 = vpop.f32.mrb[0].mxu0
    %529 = vmatprep.mubr.f32.mxu0 0.0
    %530 = vmatmul.mubr.f32.gmra.mrb[0].mxu0 %v218
    %v531 = vpop.f32.mrb[0].mxu0
    %v532 = vadd.f32 0.0, %v531
    %v533 = vpop.f32.mrb[0].mxu0
    %534 = vmatprep.mubr.f32.mxu0 0.0
    %535 = vmatmul.mubr.f32.gmra.mrb[0].mxu0 %v221
    %v536 = vpop.f32.mrb[0].mxu0
    %v537 = vadd.f32 0.0, %v536
    %v538 = vpop.f32.mrb[0].mxu0
    %539 = vmatprep.mubr.f32.mxu0 0.0
    %540 = vmatmul.mubr.f32.gmra.mrb[0].mxu0 %v224
    %v541 = vpop.f32.mrb[0].mxu0
    %v542 = vadd.f32 0.0, %v541
    %v543 = vpop.f32.mrb[0].mxu0
    %544 = vdwg.mxu0
    %vm545 = vcmask 261120
    %546 = vst.msk [vmem:[%s4] sm:$0xff] %vm545, %v297
    %547 = vst.msk [vmem:[%s4 + $0x8] sm:$0xff] %vm545, %v302
    %548 = vst.msk [vmem:[%s4 + $0x10] sm:$0xff] %vm545, %v307
    %549 = vst.msk [vmem:[%s4 + $0x18] sm:$0xff] %vm545, %v312
    %550 = vst.msk [vmem:[%s4 + $0x20] sm:$0xff] %vm545, %v317
    %551 = vst.msk [vmem:[%s4 + $0x28] sm:$0xff] %vm545, %v322
    %552 = vst.msk [vmem:[%s4 + $0x30] sm:$0xff] %vm545, %v327
    %553 = vst.msk [vmem:[%s4 + $0x38] sm:$0xff] %vm545, %v332
    %554 = vst.msk [vmem:[%s4 + $0x40] sm:$0xff] %vm545, %v337
    %555 = vst.msk [vmem:[%s4 + $0x48] sm:$0xff] %vm545, %v342
    %556 = vst.msk [vmem:[%s4 + $0x50] sm:$0xff] %vm545, %v347
    %557 = vst.msk [vmem:[%s4 + $0x58] sm:$0xff] %vm545, %v352
    %558 = vst.msk [vmem:[%s4 + $0x60] sm:$0xff] %vm545, %v357
    %559 = vst.msk [vmem:[%s4 + $0x68] sm:$0xff] %vm545, %v362
    %560 = vst.msk [vmem:[%s4 + $0x70] sm:$0xff] %vm545, %v367
    %561 = vst.msk [vmem:[%s4 + $0x78] sm:$0xff] %vm545, %v372
    %562 = vst.msk [vmem:[%s4 + $0x80] sm:$0xff] %vm545, %v377
    %563 = vst.msk [vmem:[%s4 + $0x88] sm:$0xff] %vm545, %v382
    %564 = vst.msk [vmem:[%s4 + $0x90] sm:$0xff] %vm545, %v387
    %565 = vst.msk [vmem:[%s4 + $0x98] sm:$0xff] %vm545, %v392
    %566 = vst.msk [vmem:[%s4 + $0xa0] sm:$0xff] %vm545, %v397
    %567 = vst.msk [vmem:[%s4 + $0xa8] sm:$0xff] %vm545, %v402
    %568 = vst.msk [vmem:[%s4 + $0xb0] sm:$0xff] %vm545, %v407
    %569 = vst.msk [vmem:[%s4 + $0xb8] sm:$0xff] %vm545, %v412
    %570 = vst.msk [vmem:[%s4 + $0xc0] sm:$0xff] %vm545, %v417
    %571 = vst.msk [vmem:[%s4 + $0xc8] sm:$0xff] %vm545, %v422
    %572 = vst.msk [vmem:[%s4 + $0xd0] sm:$0xff] %vm545, %v427
    %573 = vst.msk [vmem:[%s4 + $0xd8] sm:$0xff] %vm545, %v432
    %574 = vst.msk [vmem:[%s4 + $0xe0] sm:$0xff] %vm545, %v437
    %575 = vst.msk [vmem:[%s4 + $0xe8] sm:$0xff] %vm545, %v442
    %576 = vst.msk [vmem:[%s4 + $0xf0] sm:$0xff] %vm545, %v447
    %577 = vst.msk [vmem:[%s4 + $0xf8] sm:$0xff] %vm545, %v452
    %578 = vst.msk [vmem:[%s4 + $0x100] sm:$0xff] %vm545, %v457
    %579 = vst.msk [vmem:[%s4 + $0x108] sm:$0xff] %vm545, %v462
    %580 = vst.msk [vmem:[%s4 + $0x110] sm:$0xff] %vm545, %v467
    %581 = vst.msk [vmem:[%s4 + $0x118] sm:$0xff] %vm545, %v472
    %582 = vst.msk [vmem:[%s4 + $0x120] sm:$0xff] %vm545, %v477
    %583 = vst.msk [vmem:[%s4 + $0x128] sm:$0xff] %vm545, %v482
    %584 = vst.msk [vmem:[%s4 + $0x130] sm:$0xff] %vm545, %v487
    %585 = vst.msk [vmem:[%s4 + $0x138] sm:$0xff] %vm545, %v492
    %586 = vst.msk [vmem:[%s4 + $0x140] sm:$0xff] %vm545, %v497
    %587 = vst.msk [vmem:[%s4 + $0x148] sm:$0xff] %vm545, %v502
    %588 = vst.msk [vmem:[%s4 + $0x150] sm:$0xff] %vm545, %v507
    %589 = vst.msk [vmem:[%s4 + $0x158] sm:$0xff] %vm545, %v512
    %590 = vst.msk [vmem:[%s4 + $0x160] sm:$0xff] %vm545, %v517
    %591 = vst.msk [vmem:[%s4 + $0x168] sm:$0xff] %vm545, %v522
    %592 = vst.msk [vmem:[%s4 + $0x170] sm:$0xff] %vm545, %v527
    %593 = vst.msk [vmem:[%s4 + $0x178] sm:$0xff] %vm545, %v532
    %594 = vst.msk [vmem:[%s4 + $0x180] sm:$0xff] %vm545, %v537
    %vm595 = vcmask 254976
    %596 = vst.msk [vmem:[%s5] sm:$0x3] %vm595, %v542
    %v597 = vld [vmem:[%s2] sm:$0xff]
    %v598 = vld [vmem:[%s2 + $0x8] sm:$0xff]
    %v599 = vld [vmem:[%s2 + $0x10] sm:$0xff]
    %v600 = vld [vmem:[%s2 + $0x18] sm:$0xff]
    %v601 = vld [vmem:[%s3] sm:$0x1]
    %v603 = vlaneseq
    %v604 = vshrl.u32 %v603, 7
    %v605 = vsub.s32 0, %v604
    %v606 = vrot.slane %v601, %v605
    %v609 = vsel %vm545, %v542, 0
    %611 = vmatprep.subr.mxu0 0.0
    %612 = vmatpush1.msra.mxu0 %v597
    %613 = vmatprep.subr.mxu0 0.0
    %614 = vmatpush1.msra.mxu0 %v598
    %615 = vmatprep.subr.mxu0 0.0
    %616 = vmatpush1.msra.mxu0 %v599
    %617 = vmatprep.subr.mxu0 0.0
    %618 = vmatpush1.msra.mxu0 %v600
    %619 = vmatprep.subr.mxu0 0.0
    %620 = vmatpush1.msra.mxu0 0.0
    %621 = vmatprep.subr.mxu0 0.0
    %622 = vmatpush1.msra.mxu0 0.0
    %623 = vmatprep.subr.mxu0 0.0
    %624 = vmatpush1.msra.mxu0 0.0
    %625 = vmatprep.subr.mxu0 0.0
    %626 = vmatpush1.msra.mxu0 0.0
    %627 = vmatprep.subr.mxu0 0.0
    %628 = vmatpush1.msra.mxu0 0.0
    %629 = vmatprep.subr.mxu0 0.0
    %630 = vmatpush1.msra.mxu0 0.0
    %631 = vmatprep.subr.mxu0 0.0
    %632 = vmatpush1.msra.mxu0 0.0
    %633 = vmatprep.subr.mxu0 0.0
    %634 = vmatpush1.msra.mxu0 0.0
    %635 = vmatprep.subr.mxu0 0.0
    %636 = vmatpush1.msra.mxu0 0.0
    %637 = vmatprep.subr.mxu0 0.0
    %638 = vmatpush1.msra.mxu0 0.0
    %639 = vmatprep.subr.mxu0 0.0
    %640 = vmatpush1.msra.mxu0 0.0
    %641 = vmatprep.subr.mxu0 0.0
    %642 = vmatpush1.msra.mxu0 0.0
    %643 = vmatprep.subr.mxu0 0.0
    %644 = vmatpush1.msra.mxu0 0.0
    %645 = vmatprep.subr.mxu0 0.0
    %646 = vmatpush1.msra.mxu0 0.0
    %647 = vmatprep.subr.mxu0 0.0
    %648 = vmatpush1.msra.mxu0 0.0
    %649 = vmatprep.subr.mxu0 0.0
    %650 = vmatpush1.msra.mxu0 0.0
    %651 = vmatprep.subr.mxu0 0.0
    %652 = vmatpush1.msra.mxu0 0.0
    %653 = vmatprep.subr.mxu0 0.0
    %654 = vmatpush1.msra.mxu0 0.0
    %655 = vmatprep.subr.mxu0 0.0
    %656 = vmatpush1.msra.mxu0 0.0
    %657 = vmatprep.subr.mxu0 0.0
    %658 = vmatpush1.msra.mxu0 0.0
    %659 = vmatprep.subr.mxu0 0.0
    %660 = vmatpush1.msra.mxu0 0.0
    %661 = vmatprep.subr.mxu0 0.0
    %662 = vmatpush1.msra.mxu0 0.0
    %663 = vmatprep.subr.mxu0 0.0
    %664 = vmatpush1.msra.mxu0 0.0
    %665 = vmatprep.subr.mxu0 0.0
    %666 = vmatpush1.msra.mxu0 0.0
    %667 = vmatprep.subr.mxu0 0.0
    %668 = vmatpush1.msra.mxu0 0.0
    %669 = vmatprep.subr.mxu0 0.0
    %670 = vmatpush1.msra.mxu0 0.0
    %671 = vmatprep.subr.mxu0 0.0
    %672 = vmatpush1.msra.mxu0 0.0
    %673 = vmatprep.subr.mxu0 0.0
    %674 = vmatpush1.msra.mxu0 0.0
    %675 = vmatprep.mubr.f32.mxu0 0.0
    %676 = vmatmul.mubr.f32.gmra.mrb[0].mxu0 %v609
    %v677 = vpop.f32.mrb[0].mxu0
    %v678 = vadd.f32 %v606, %v677
    %v679 = vpop.f32.mrb[0].mxu0
    %680 = vdwg.mxu0
    %vm681 = vcmask 517120
    %682 = vst.msk [vmem:[#allocation2] sm:$0x3] %vm681, %v678
    // Predicated region
    $region18: #{testmodel_forward.1} parent=1 // pred_check
      _
    $region19: #{testmodel_forward.1} parent=1 // pred_check_branch
      %684 = sbr.rel (0) target = $region21
    $region20: #{testmodel_forward.1} parent=1 // pred_region
      _
    $region21: #{testmodel_forward.1} parent=1 // pred_fallthru
      _
    // Predicated region
    $region22: #{testmodel_forward.1} parent=1 // pred_check
      _
    $region23: #{testmodel_forward.1} parent=1 // pred_check_branch
      %686 = sbr.rel (0) target = $region25
    $region24: #{testmodel_forward.1} parent=1 // pred_region
      _
    $region25: #{testmodel_forward.1} parent=1 // pred_fallthru
      _
    // Predicated region
    $region26: #{testmodel_forward.1} parent=1 // pred_check
      _
    $region27: #{testmodel_forward.1} parent=1 // pred_check_branch
      %688 = sbr.rel (0) target = $region29
    $region28: #{testmodel_forward.1} parent=1 // pred_region
      %s690 = ssub.s32 32, 32
      %691 = vsyncadd [#allocation3], %s690
      %s693 = sshll.u32 [#allocation2], 4
      %s694 = int_to_ptr.vmem [resolvable:$true] %s693
      %696 = dma.vmem_to_hbm [thread:$0]  %s694, 32, %s6, [#allocation3]
    $region29: #{testmodel_forward.1} parent=1 // pred_fallthru
      _
    // Predicated region
    $region30: #{testmodel_forward.1} parent=1 // pred_check
      _
    $region31: #{testmodel_forward.1} parent=1 // pred_check_branch
      %698 = sbr.rel (0) target = $region33
    $region32: #{testmodel_forward.1} parent=1 // pred_region
      _
    $region33: #{testmodel_forward.1} parent=1 // pred_fallthru
      _
    // Predicated region
    $region34: #{testmodel_forward.1} parent=1 // pred_check
      _
    $region35: #{testmodel_forward.1} parent=1 // pred_check_branch
      %700 = sbr.rel (0) target = $region37
    $region36: #{testmodel_forward.1} parent=1 // pred_region
      _
    $region37: #{testmodel_forward.1} parent=1 // pred_fallthru
      _
    // Predicated region
    $region38: #{testmodel_forward.1} parent=1 // pred_check
      _
    $region39: #{testmodel_forward.1} parent=1 // pred_check_branch
      %702 = sbr.rel (0) target = $region41
    $region40: #{testmodel_forward.1} parent=1 // pred_region
      %703 = dma.done [#allocation3], 32
    $region41: #{testmodel_forward.1} parent=1 // pred_fallthru
      _
    %704 = vsyncpa [#allocation3], 1

</llo_original>
